<compile_context>
chip_gen: v7x
topology: tpu7x:2x2x1
jax: 0.10.0
libtpu: 0.0.40
codegen_flags: <defaults>
</compile_context>

<pallas_src>
import jax
import jax.numpy as jnp
from jax.experimental import pallas as pl
from jax.experimental.pallas import tpu as pltpu

LANES = 128
MAX_TILE_ROWS = 1024  # 1024 x 128 f32 = 512 KiB per input block


def _masked_mse_kernel(pred_ref, target_ref, sum_ref, cnt_ref, acc_sq, acc_cnt):
    j = pl.program_id(1)  # sequential ("arbitrary") reduction axis

    @pl.when(j == 0)
    def _():
        acc_sq[...] = jnp.zeros_like(acc_sq)
        acc_cnt[...] = jnp.zeros_like(acc_cnt)

    t = target_ref[...].astype(jnp.float32)
    p = pred_ref[...].astype(jnp.float32)
    valid = t > 0.0                           # valid_mask = target > 0
    d = jnp.where(valid, t - p, 0.0)          # masked diff
    acc_sq[...] += d * d                      # elementwise VPU adds only
    acc_cnt[...] += jnp.where(valid, 1.0, 0.0)

    @pl.when(j == pl.num_programs(1) - 1)
    def _():
        # One cross-lane reduction per core, in the epilogue.  The scalar is
        # broadcast across the whole (8, 128) output block (unmasked store);
        # the wrapper reads element [core*8, 0].
        sum_ref[...] = jnp.broadcast_to(jnp.sum(acc_sq[...]), sum_ref.shape)
        cnt_ref[...] = jnp.broadcast_to(jnp.sum(acc_cnt[...]), cnt_ref.shape)


def masked_mse_loss(pred, target):
    assert pred.ndim == target.ndim, "inconsistent dimensions"
    assert pred.shape == target.shape

    flat_p = pred.reshape(-1)
    flat_t = target.reshape(-1)
    n = flat_p.size

    rows = n // LANES                              # complete 128-lane rows
    tile_rows = min(MAX_TILE_ROWS, (rows // 8) * 8)

    total_sum = jnp.zeros((), jnp.float32)
    total_cnt = jnp.zeros((), jnp.float32)

    n_bulk = 0
    if tile_rows >= 8:
        steps_total = rows // tile_rows
        n_par = 2 if steps_total >= 2 else 1       # 2-way split for v7x megacore
        steps_per_core = steps_total // n_par
        bulk_rows = n_par * steps_per_core * tile_rows
        n_bulk = bulk_rows * LANES

        if n == rows * LANES:
            # Contiguous reshape -- no HBM copy.
            pred2d = flat_p.reshape(rows, LANES)
            targ2d = flat_t.reshape(rows, LANES)
        else:
            # Sub-128 remainder: one prefix slice; remainder handled in the tail.
            pred2d = flat_p[: rows * LANES].reshape(rows, LANES)
            targ2d = flat_t[: rows * LANES].reshape(rows, LANES)

        def in_map(c, j):
            return (c * steps_per_core + j, 0)

        s, c = pl.pallas_call(
            _masked_mse_kernel,
            out_shape=(
                jax.ShapeDtypeStruct((n_par * 8, LANES), jnp.float32),  # sums
                jax.ShapeDtypeStruct((n_par * 8, LANES), jnp.float32),  # counts
            ),
            grid_spec=pltpu.PrefetchScalarGridSpec(
                num_scalar_prefetch=0,
                grid=(n_par, steps_per_core),
                in_specs=[
                    pl.BlockSpec((tile_rows, LANES), in_map),
                    pl.BlockSpec((tile_rows, LANES), in_map),
                ],
                out_specs=[
                    pl.BlockSpec((8, LANES), lambda c, j: (c, 0)),
                    pl.BlockSpec((8, LANES), lambda c, j: (c, 0)),
                ],
                scratch_shapes=[
                    pltpu.VMEM((tile_rows, LANES), jnp.float32),  # sq partials
                    pltpu.VMEM((tile_rows, LANES), jnp.float32),  # count partials
                ],
            ),
            compiler_params=pltpu.CompilerParams(
                dimension_semantics=("parallel", "arbitrary"),
            ),
        )(pred2d, targ2d)

        # One representative element per core-block (value is broadcast).
        total_sum = total_sum + jnp.sum(s[::8, 0])
        total_cnt = total_cnt + jnp.sum(c[::8, 0])

    if n_bulk < n:
        # Tiny un-tiled tail: plain JAX, combined before the divide.
        tp = flat_p[n_bulk:].astype(jnp.float32)
        tt = flat_t[n_bulk:].astype(jnp.float32)
        tvalid = tt > 0.0
        td = jnp.where(tvalid, tt - tp, 0.0)
        total_sum = total_sum + jnp.sum(td * td)
        total_cnt = total_cnt + jnp.sum(tvalid.astype(jnp.float32))

    # 0/0 -> NaN if no element has target > 0 (matches torch mean over empty).
    return total_sum / total_cnt


def _reference(pred, target):
    mask = (target > 0).astype(jnp.float32)
    diff = (target.astype(jnp.float32) - pred.astype(jnp.float32)) * mask
    return jnp.sum(diff * diff) / jnp.sum(mask)


if __name__ == "__main__":
    key = jax.random.PRNGKey(0)
    k1, k2, k3, k4 = jax.random.split(key, 4)

    # Test 1: NCHW input whose size is a multiple of 128 -> pure kernel path.
    B, C, H, W = 2, 4, 16, 16
    pred = jax.random.normal(k1, (B, C, H, W), dtype=jnp.float32)
    target = jax.random.normal(k2, (B, C, H, W), dtype=jnp.float32)

    loss = masked_mse_loss(pred, target)
    jax.block_until_ready(loss)
    ref = _reference(pred, target)
    assert jnp.allclose(loss, ref, rtol=1e-5, atol=1e-5), (loss, ref)

    # Test 2: odd spatial size -> kernel bulk + plain-JAX tail combination.
    pred2 = jax.random.normal(k3, (2, 4, 17, 19), dtype=jnp.float32)
    target2 = jax.random.normal(k4, (2, 4, 17, 19), dtype=jnp.float32)
    loss2 = masked_mse_loss(pred2, target2)
    jax.block_until_ready(loss2)
    ref2 = _reference(pred2, target2)
    assert jnp.allclose(loss2, ref2, rtol=1e-5, atol=1e-5), (loss2, ref2)

    print("KERNEL_OK")
</pallas_src>

<mosaic_0001>
module attributes {stable_mosaic.version = 11 : i64} {
  func.func @_masked_mse_kernel(%arg0: i32, %arg1: i32, %arg2: memref<16x128xf32, #tpu.memory_space<vmem>>, %arg3: memref<16x128xf32, #tpu.memory_space<vmem>>, %arg4: memref<8x128xf32, #tpu.memory_space<vmem>>, %arg5: memref<8x128xf32, #tpu.memory_space<vmem>>, %arg6: memref<16x128xf32, #tpu.memory_space<vmem>>, %arg7: memref<16x128xf32, #tpu.memory_space<vmem>>) attributes {dimension_semantics = [#tpu.dimension_semantics<parallel>, #tpu.dimension_semantics<arbitrary>], iteration_bounds = array<i64: 1, 1>, scalar_prefetch = 0 : i64, scratch_operands = 2 : i64, tpu.core_type = #tpu.core_type<tc>, window_params = [{transform_indices = @transform_0, window_bounds = array<i64: 16, 128>}, {transform_indices = @transform_1, window_bounds = array<i64: 16, 128>}, {transform_indices = @transform_2, window_bounds = array<i64: 8, 128>}, {transform_indices = @transform_3, window_bounds = array<i64: 8, 128>}]} {
    %c0_i32 = arith.constant 0 : i32
    %0 = arith.cmpi eq, %arg1, %c0_i32 : i32
    %1 = arith.extui %0 : i1 to i32
    %c0_i32_0 = arith.constant 0 : i32
    %2 = arith.cmpi ne, %1, %c0_i32_0 : i32
    scf.if %2 {
      %cst_17 = arith.constant 0.000000e+00 : f32
      %23 = vector.broadcast %cst_17 : f32 to vector<16x128xf32>
      %c0_18 = arith.constant 0 : index
      %c0_19 = arith.constant 0 : index
      %24 = vector.load %arg6[%c0_18, %c0_19] : memref<16x128xf32, #tpu.memory_space<vmem>>, vector<16x128xf32>
      tpu.vector_store %arg6[%c0_18, %c0_19], %23 {strides = array<i32>} : memref<16x128xf32, #tpu.memory_space<vmem>>, vector<16x128xf32>,
      %cst_20 = arith.constant 0.000000e+00 : f32
      %25 = vector.broadcast %cst_20 : f32 to vector<16x128xf32>
      %c0_21 = arith.constant 0 : index
      %c0_22 = arith.constant 0 : index
      %26 = vector.load %arg7[%c0_21, %c0_22] : memref<16x128xf32, #tpu.memory_space<vmem>>, vector<16x128xf32>
      tpu.vector_store %arg7[%c0_21, %c0_22], %25 {strides = array<i32>} : memref<16x128xf32, #tpu.memory_space<vmem>>, vector<16x128xf32>,
    } else {
    }
    %c0 = arith.constant 0 : index
    %c0_1 = arith.constant 0 : index
    %3 = vector.load %arg3[%c0, %c0_1] : memref<16x128xf32, #tpu.memory_space<vmem>>, vector<16x128xf32>
    %c0_2 = arith.constant 0 : index
    %c0_3 = arith.constant 0 : index
    %4 = vector.load %arg2[%c0_2, %c0_3] : memref<16x128xf32, #tpu.memory_space<vmem>>, vector<16x128xf32>
    %cst = arith.constant 0.000000e+00 : f32
    %5 = vector.broadcast %cst : f32 to vector<16x128xf32>
    %6 = arith.cmpf ogt, %3, %5 : vector<16x128xf32>
    %7 = arith.subf %3, %4 : vector<16x128xf32>
    %cst_4 = arith.constant 0.000000e+00 : f32
    %8 = vector.broadcast %cst_4 : f32 to vector<16x128xf32>
    %9 = arith.select %6, %7, %8 : vector<16x128xi1>, vector<16x128xf32>
    %c0_5 = arith.constant 0 : index
    %c0_6 = arith.constant 0 : index
    %10 = vector.load %arg6[%c0_5, %c0_6] : memref<16x128xf32, #tpu.memory_space<vmem>>, vector<16x128xf32>
    %11 = arith.mulf %9, %9 : vector<16x128xf32>
    %12 = arith.addf %10, %11 : vector<16x128xf32>
    %c0_7 = arith.constant 0 : index
    %c0_8 = arith.constant 0 : index
    %13 = vector.load %arg6[%c0_7, %c0_8] : memref<16x128xf32, #tpu.memory_space<vmem>>, vector<16x128xf32>
    tpu.vector_store %arg6[%c0_7, %c0_8], %12 {strides = array<i32>} : memref<16x128xf32, #tpu.memory_space<vmem>>, vector<16x128xf32>,
    %c0_9 = arith.constant 0 : index
    %c0_10 = arith.constant 0 : index
    %14 = vector.load %arg7[%c0_9, %c0_10] : memref<16x128xf32, #tpu.memory_space<vmem>>, vector<16x128xf32>
    %cst_11 = arith.constant 1.000000e+00 : f32
    %cst_12 = arith.constant 0.000000e+00 : f32
    %15 = vector.broadcast %cst_11 : f32 to vector<16x128xf32>
    %16 = vector.broadcast %cst_12 : f32 to vector<16x128xf32>
    %17 = arith.select %6, %15, %16 : vector<16x128xi1>, vector<16x128xf32>
    %18 = arith.addf %14, %17 : vector<16x128xf32>
    %c0_13 = arith.constant 0 : index
    %c0_14 = arith.constant 0 : index
    %19 = vector.load %arg7[%c0_13, %c0_14] : memref<16x128xf32, #tpu.memory_space<vmem>>, vector<16x128xf32>
    tpu.vector_store %arg7[%c0_13, %c0_14], %18 {strides = array<i32>} : memref<16x128xf32, #tpu.memory_space<vmem>>, vector<16x128xf32>,
    %c0_i32_15 = arith.constant 0 : i32
    %20 = arith.cmpi eq, %arg1, %c0_i32_15 : i32
    %21 = arith.extui %20 : i1 to i32
    %c0_i32_16 = arith.constant 0 : i32
    %22 = arith.cmpi ne, %21, %c0_i32_16 : i32
    scf.if %22 {
      %c0_17 = arith.constant 0 : index
      %c0_18 = arith.constant 0 : index
      %23 = vector.load %arg6[%c0_17, %c0_18] : memref<16x128xf32, #tpu.memory_space<vmem>>, vector<16x128xf32>
      %24 = vector.shape_cast %23 : vector<16x128xf32> to vector<1x16x128xf32>
      %cst_19 = arith.constant dense<0.000000e+00> : vector<1xf32>
      %25 = vector.multi_reduction <add>, %24, %cst_19 [1, 2] : vector<1x16x128xf32> to vector<1xf32>
      %26 = vector.shape_cast %25 : vector<1xf32> to vector<1x1x1xf32>
      %27 = vector.extract %26[0, 0, 0] : f32 from vector<1x1x1xf32>
      %28 = vector.broadcast %27 : f32 to vector<8x128xf32>
      %c0_20 = arith.constant 0 : index
      %c0_21 = arith.constant 0 : index
      %29 = vector.load %arg4[%c0_20, %c0_21] : memref<8x128xf32, #tpu.memory_space<vmem>>, vector<8x128xf32>
      tpu.vector_store %arg4[%c0_20, %c0_21], %28 {strides = array<i32>} : memref<8x128xf32, #tpu.memory_space<vmem>>, vector<8x128xf32>,
      %c0_22 = arith.constant 0 : index
      %c0_23 = arith.constant 0 : index
      %30 = vector.load %arg7[%c0_22, %c0_23] : memref<16x128xf32, #tpu.memory_space<vmem>>, vector<16x128xf32>
      %31 = vector.shape_cast %30 : vector<16x128xf32> to vector<1x16x128xf32>
      %cst_24 = arith.constant dense<0.000000e+00> : vector<1xf32>
      %32 = vector.multi_reduction <add>, %31, %cst_24 [1, 2] : vector<1x16x128xf32> to vector<1xf32>
      %33 = vector.shape_cast %32 : vector<1xf32> to vector<1x1x1xf32>
      %34 = vector.extract %33[0, 0, 0] : f32 from vector<1x1x1xf32>
      %35 = vector.broadcast %34 : f32 to vector<8x128xf32>
      %c0_25 = arith.constant 0 : index
      %c0_26 = arith.constant 0 : index
      %36 = vector.load %arg5[%c0_25, %c0_26] : memref<8x128xf32, #tpu.memory_space<vmem>>, vector<8x128xf32>
      tpu.vector_store %arg5[%c0_25, %c0_26], %35 {strides = array<i32>} : memref<8x128xf32, #tpu.memory_space<vmem>>, vector<8x128xf32>,
    } else {
    }
    return
  }
  func.func @transform_0(%arg0: i32, %arg1: i32) -> (i32, i32) {
    %c1_i32 = arith.constant 1 : i32
    %0 = arith.muli %arg0, %c1_i32 : i32
    %1 = arith.addi %0, %arg1 : i32
    %c0_i32 = arith.constant 0 : i32
    %c0_i32_0 = arith.constant 0 : i32
    return %1, %c0_i32 : i32, i32
  }
  func.func @transform_1(%arg0: i32, %arg1: i32) -> (i32, i32) {
    %c1_i32 = arith.constant 1 : i32
    %0 = arith.muli %arg0, %c1_i32 : i32
    %1 = arith.addi %0, %arg1 : i32
    %c0_i32 = arith.constant 0 : i32
    %c0_i32_0 = arith.constant 0 : i32
    return %1, %c0_i32 : i32, i32
  }
  func.func @transform_2(%arg0: i32, %arg1: i32) -> (i32, i32) {
    %c0_i32 = arith.constant 0 : i32
    %c0_i32_0 = arith.constant 0 : i32
    return %arg0, %c0_i32 : i32, i32
  }
  func.func @transform_3(%arg0: i32, %arg1: i32) -> (i32, i32) {
    %c0_i32 = arith.constant 0 : i32
    %c0_i32_0 = arith.constant 0 : i32
    return %arg0, %c0_i32 : i32, i32
  }
}

</mosaic_0001>

<llo_original>
// kernel: tpu_custom_call.1
$region0: #{tpu_custom_call.1}
  #allocation0 [shape = 'u32[]', space=smem, size = 0x4, offset = 0x4, fixed_abs, tag = 'smem constant byte address 0x4 - core index']
  #allocation1 [shape = 'u32[144,128]{1,0:T(1,128)}', space=vmem, size = 0x12000, scoped, tag = 'internal scratch']
  #allocation2 [shape = 'f32[16,128]{1,0:T(8,128)}', space=vmem, size = 0x2000, scoped, tag = 'scratch operand']
  #allocation3 [shape = 'f32[16,128]{1,0:T(8,128)}', space=vmem, size = 0x2000, scoped, tag = 'scratch operand']
  %s0 = inlined_call_operand.hbm [shape: f32[16,128], index: 0, kind: input, shape index: {}]
  %s1 = inlined_call_operand.hbm [shape: f32[16,128], index: 1, kind: input, shape index: {}]
  %s2 = inlined_call_operand.hbm [shape: f32[8,128], index: 2, kind: output, shape index: {0}]
  %s3 = inlined_call_operand.hbm [shape: f32[8,128], index: 3, kind: output, shape index: {1}]
  %4 = xla_tuple %s2, %s3
  %s5 = sld [smem:[#allocation0]]
  $region42: #{tpu_custom_call.1} parent=0
    _
  %s7 = ssub.s32 1, %s5
  %s8 = scalar_select 0, %s7, %s5
  $region1: #{tpu_custom_call.1} parent=0
    #allocation4 [shape = 'u8[8192]{0}', space=vmem, size = 0x2000, scoped, tag = 'input window, operand 0, single buffered']
    #allocation5 [shape = 's32[1]{0}', space=sflag, size = 0x4, scoped, tag = 'scoped memory for tpu_custom_call.1']
    #allocation6 [shape = 's32[1]{0}', space=sflag, size = 0x4, scoped, tag = 'scoped memory for tpu_custom_call.1']
    #allocation7 [shape = 'u8[8192]{0}', space=vmem, size = 0x2000, scoped, tag = 'input window, operand 1, single buffered']
    #allocation8 [shape = 's32[1]{0}', space=sflag, size = 0x4, scoped, tag = 'scoped memory for tpu_custom_call.1']
    #allocation9 [shape = 'u8[4096]{0}', space=vmem, size = 0x1000, scoped, tag = 'output window, operand 0, single buffered']
    #allocation10 [shape = 'u8[4096]{0}', space=vmem, size = 0x1000, scoped, tag = 'output window, operand 1, single buffered']
    #allocation11 [shape = 's32[1]{0}', space=sflag, size = 0x4, scoped, tag = 'scoped memory for tpu_custom_call.1']
    %9 = vsyncpa [#allocation5], 0
    %10 = vsyncpa [#allocation8], 0
    %11 = vsyncpa [#allocation6], 0
    %12 = vsyncpa [#allocation11], 0
    // Predicated region
    $region2: #{tpu_custom_call.1} parent=1 // pred_check
      _
    $region3: #{tpu_custom_call.1} parent=1 // pred_check_branch
      %14 = sbr.rel (0) target = $region5
    $region4: #{tpu_custom_call.1} parent=1 // pred_region
      %s15 = sadd.s32 0, 0
      %s16 = smul.u32 2, %s15
      %s18 = ssub.s32 256, 256
      %19 = vsyncadd [#allocation5], %s18
      %s20 = smul.addr %s16, 128
      %s21 = scalar_lea.hbm %s0, %s20
      %s22 = sshll.u32 [#allocation4], 4
      %s23 = int_to_ptr.vmem [resolvable:$true] %s22
      %28 = dma.hbm_to_vmem [thread:$0]  %s21, 256, %s23, [#allocation5], 128, 128, 8
    $region5: #{tpu_custom_call.1} parent=1 // pred_fallthru
      _
    // Predicated region
    $region6: #{tpu_custom_call.1} parent=1 // pred_check
      _
    $region7: #{tpu_custom_call.1} parent=1 // pred_check_branch
      %30 = sbr.rel (0) target = $region9
    $region8: #{tpu_custom_call.1} parent=1 // pred_region
      %s31 = sadd.s32 0, 0
      %s32 = smul.u32 2, %s31
      %s34 = ssub.s32 256, 256
      %35 = vsyncadd [#allocation8], %s34
      %s36 = smul.addr %s32, 128
      %s37 = scalar_lea.hbm %s1, %s36
      %s38 = sshll.u32 [#allocation7], 4
      %s39 = int_to_ptr.vmem [resolvable:$true] %s38
      %44 = dma.hbm_to_vmem [thread:$0]  %s37, 256, %s39, [#allocation8], 128, 128, 8
    $region9: #{tpu_custom_call.1} parent=1 // pred_fallthru
      _
    // Predicated region
    $region10: #{tpu_custom_call.1} parent=1 // pred_check
      _
    $region11: #{tpu_custom_call.1} parent=1 // pred_check_branch
      %46 = sbr.rel (0) target = $region13
    $region12: #{tpu_custom_call.1} parent=1 // pred_region
      %47 = dma.done [#allocation5], 256
    $region13: #{tpu_custom_call.1} parent=1 // pred_fallthru
      _
    // Predicated region
    $region14: #{tpu_custom_call.1} parent=1 // pred_check
      _
    $region15: #{tpu_custom_call.1} parent=1 // pred_check_branch
      %49 = sbr.rel (0) target = $region17
    $region16: #{tpu_custom_call.1} parent=1 // pred_region
      %50 = dma.done [#allocation8], 256
    $region17: #{tpu_custom_call.1} parent=1 // pred_fallthru
      _
    %s51 = sadd.s32 0, 0
    %s52 = smul.u32 2, %s51
    %s53 = sadd.s32 0, 0
    %s54 = smul.u32 2, %s53
    %p55 = scmp.eq.s32.totalorder 0, 0
    // Predicated region
    $region18: #{tpu_custom_call.1} parent=1 // pred_check
      %p56 = pneg %p55
    $region19: #{tpu_custom_call.1} parent=1 // pred_check_branch
      %58 = sbr.rel (%p56) target = $region21
    $region20: #{tpu_custom_call.1} parent=1 // pred_region
      %59 = vst [vmem:[#allocation2] sm:$0xff] 0.0
      %60 = vst [vmem:[#allocation2 + $0x8] sm:$0xff] 0.0
      %61 = vst [vmem:[#allocation3] sm:$0xff] 0.0
      %62 = vst [vmem:[#allocation3 + $0x8] sm:$0xff] 0.0
    $region21: #{tpu_custom_call.1} parent=1 // pred_fallthru
      _
    %v63 = vld [vmem:[#allocation7] sm:$0xff]
    %v64 = vld [vmem:[#allocation7 + $0x8] sm:$0xff]
    %v65 = vld [vmem:[#allocation4] sm:$0xff]
    %v66 = vld [vmem:[#allocation4 + $0x8] sm:$0xff]
    %vm67 = vcmp.gt.f32.partialorder %v63, 0.0
    %vm68 = vcmp.gt.f32.partialorder %v64, 0.0
    %v69 = vsub.f32 %v63, %v65
    %v70 = vsub.f32 %v64, %v66
    %v71 = vsel %vm67, %v69, 0.0
    %v72 = vsel %vm68, %v70, 0.0
    %v73 = vld [vmem:[#allocation2] sm:$0xff]
    %v74 = vld [vmem:[#allocation2 + $0x8] sm:$0xff]
    %v75 = vmul.f32 %v71, %v71
    %v76 = vmul.f32 %v72, %v72
    %v77 = vadd.f32 %v73, %v75
    %v78 = vadd.f32 %v74, %v76
    %79 = vst [vmem:[#allocation2] sm:$0xff] %v77
    %80 = vst [vmem:[#allocation2 + $0x8] sm:$0xff] %v78
    %v81 = vld [vmem:[#allocation3] sm:$0xff]
    %v82 = vld [vmem:[#allocation3 + $0x8] sm:$0xff]
    %v83 = vsel %vm67, 1.0, 0.0
    %v84 = vsel %vm68, 1.0, 0.0
    %v85 = vadd.f32 %v81, %v83
    %v86 = vadd.f32 %v82, %v84
    %87 = vst [vmem:[#allocation3] sm:$0xff] %v85
    %88 = vst [vmem:[#allocation3 + $0x8] sm:$0xff] %v86
    // Predicated region
    $region22: #{tpu_custom_call.1} parent=1 // pred_check
      %p89 = pneg %p55
    $region23: #{tpu_custom_call.1} parent=1 // pred_check_branch
      %91 = sbr.rel (%p89) target = $region25
    $region24: #{tpu_custom_call.1} parent=1 // pred_region
      %v92 = vld [vmem:[#allocation2] sm:$0xff]
      %v93 = vld [vmem:[#allocation2 + $0x8] sm:$0xff]
      %v94 = vadd.f32 %v92, %v93
      %95 = vadd.xlane.f32.xlu0 %v94
      %v96 = vpop.xlane.xlu0 %95
      %v97 = vrot.slane %v96, 4
      %v98 = vadd.f32 %v96, %v97
      %v99 = vrot.slane %v98, 2
      %v100 = vadd.f32 %v98, %v99
      %v101 = vrot.slane %v100, 1
      %v102 = vadd.f32 %v100, %v101
      %s103 = vtos %v102
      %v104 = vstv %s103
      %105 = vst [vmem:[#allocation9] sm:$0xff] %v104
      %v106 = vld [vmem:[#allocation3] sm:$0xff]
      %v107 = vld [vmem:[#allocation3 + $0x8] sm:$0xff]
      %v108 = vadd.f32 %v106, %v107
      %109 = vadd.xlane.f32.xlu0 %v108
      %v110 = vpop.xlane.xlu0 %109
      %v111 = vrot.slane %v110, 4
      %v112 = vadd.f32 %v110, %v111
      %v113 = vrot.slane %v112, 2
      %v114 = vadd.f32 %v112, %v113
      %v115 = vrot.slane %v114, 1
      %v116 = vadd.f32 %v114, %v115
      %s117 = vtos %v116
      %v118 = vstv %s117
      %119 = vst [vmem:[#allocation10] sm:$0xff] %v118
    $region25: #{tpu_custom_call.1} parent=1 // pred_fallthru
      _
    // Predicated region
    $region26: #{tpu_custom_call.1} parent=1 // pred_check
      _
    $region27: #{tpu_custom_call.1} parent=1 // pred_check_branch
      %121 = sbr.rel (0) target = $region29
    $region28: #{tpu_custom_call.1} parent=1 // pred_region
      %s123 = ssub.s32 128, 128
      %124 = vsyncadd [#allocation6], %s123
      %s126 = sshll.u32 [#allocation9], 4
      %s127 = int_to_ptr.vmem [resolvable:$true] %s126
      %129 = dma.vmem_to_hbm [thread:$0]  %s127, 128, %s2, [#allocation6]
    $region29: #{tpu_custom_call.1} parent=1 // pred_fallthru
      _
    // Predicated region
    $region30: #{tpu_custom_call.1} parent=1 // pred_check
      _
    $region31: #{tpu_custom_call.1} parent=1 // pred_check_branch
      %131 = sbr.rel (0) target = $region33
    $region32: #{tpu_custom_call.1} parent=1 // pred_region
      %s133 = ssub.s32 128, 128
      %134 = vsyncadd [#allocation11], %s133
      %s136 = sshll.u32 [#allocation10], 4
      %s137 = int_to_ptr.vmem [resolvable:$true] %s136
      %139 = dma.vmem_to_hbm [thread:$0]  %s137, 128, %s3, [#allocation11]
    $region33: #{tpu_custom_call.1} parent=1 // pred_fallthru
      _
    // Predicated region
    $region34: #{tpu_custom_call.1} parent=1 // pred_check
      _
    $region35: #{tpu_custom_call.1} parent=1 // pred_check_branch
      %141 = sbr.rel (0) target = $region37
    $region36: #{tpu_custom_call.1} parent=1 // pred_region
      %142 = dma.done [#allocation6], 128
    $region37: #{tpu_custom_call.1} parent=1 // pred_fallthru
      _
    // Predicated region
    $region38: #{tpu_custom_call.1} parent=1 // pred_check
      _
    $region39: #{tpu_custom_call.1} parent=1 // pred_check_branch
      %144 = sbr.rel (0) target = $region41
    $region40: #{tpu_custom_call.1} parent=1 // pred_region
      %145 = dma.done [#allocation11], 128
    $region41: #{tpu_custom_call.1} parent=1 // pred_fallthru
      _
    %146 = vsyncpa [#allocation5], 1
    %147 = vsyncpa [#allocation8], 1
    %148 = vsyncpa [#allocation6], 1
    %149 = vsyncpa [#allocation11], 1

</llo_original>
